<compile_context>
chip_gen: v5e
topology: v5e:2x2
jax: 0.10.0
libtpu: 0.0.40
codegen_flags: <defaults>
</compile_context>

<pallas_src>
import jax
import jax.numpy as jnp
from jax.experimental import pallas as pl
from jax.experimental.pallas import tpu as pltpu

IN_FEATURES = 28 * 28    # 784
OUT_FEATURES = 10
OUT_PADDED = 128         # MXU-friendly N for the matmul (not the output width)
MAX_TILE_B = 2048        # 2048x784 f32 tile ~6.4 MB; x2 buffers ~12.8 MB (< v5e 16 MiB)


def _round_up(x, m):
    return (x + m - 1) // m * m


def _choose_tile_b(B):
    # Multiple of 16, capped at MAX_TILE_B, aiming for >= 2 grid steps so the
    # second v7x TensorCore is used and DMA/compute/writeback overlap.
    n_tiles = max(2, pl.cdiv(B, MAX_TILE_B))
    tile = _round_up(pl.cdiv(B, n_tiles), 16)
    return max(16, min(tile, MAX_TILE_B))


def linear_kernel(x_ref, w_ref, b_ref, o_ref):
    # x_ref: (TILE_B, 784) f32   w_ref: (784, 128) bf16
    # b_ref: (1, 128) f32        o_ref: (TILE_B, 10) f32
    x_bf = x_ref[...].astype(jnp.bfloat16)                 # in-kernel cast (VPU slack)
    acc = jnp.dot(x_bf, w_ref[...],
                  preferred_element_type=jnp.float32)      # (TILE_B, 128) f32 on MXU
    out = acc + b_ref[...]                                 # f32 epilogue
    # Output is tiny vs. input: masked store of the 10 real lanes beats a
    # 12.8x padded writeback plus a post-call slice.
    o_ref[...] = out[:, :OUT_FEATURES]


def prepare_params(weight, bias):
    """One-time parameter prep (hoisted out of the per-call path):
    W (10, 784) -> transpose to (784, 10), zero-pad N to 128, cast to bf16;
    bias -> (1, 128) f32 (padded so the epilogue add stays lane-aligned)."""
    w_t = jnp.zeros((IN_FEATURES, OUT_PADDED), jnp.bfloat16)
    w_t = w_t.at[:, :OUT_FEATURES].set(weight.T.astype(jnp.bfloat16))
    b_pad = jnp.zeros((1, OUT_PADDED), jnp.float32)
    b_pad = b_pad.at[:, :OUT_FEATURES].set(bias.astype(jnp.float32))
    return w_t, b_pad


def simple_model_forward(x_nchw, w_padded, b_padded):
    """x_nchw: (B, 1, 28, 28) f32. w_padded: (784, 128) bf16, b_padded: (1, 128)
    f32 (from prepare_params). Returns (B, 10) f32."""
    B = x_nchw.shape[0]
    x_flat = x_nchw.reshape(B, IN_FEATURES)        # x.view(B, -1); stays f32, no copy

    tile_b = _choose_tile_b(B)
    grid = (pl.cdiv(B, tile_b),)                   # ragged last block handled by Pallas

    cost = pl.CostEstimate(
        flops=2 * B * IN_FEATURES * OUT_PADDED,
        transcendentals=0,
        bytes_accessed=(B * IN_FEATURES * 4              # x (f32, read once)
                        + IN_FEATURES * OUT_PADDED * 2   # W (bf16, resident)
                        + OUT_PADDED * 4                 # bias
                        + B * OUT_FEATURES * 4),         # out (f32, narrow)
    )

    out = pl.pallas_call(
        linear_kernel,
        out_shape=jax.ShapeDtypeStruct((B, OUT_FEATURES), jnp.float32),
        grid=grid,
        in_specs=[
            pl.BlockSpec((tile_b, IN_FEATURES), lambda i: (i, 0)),       # streamed
            pl.BlockSpec((IN_FEATURES, OUT_PADDED), lambda i: (0, 0)),   # resident W
            pl.BlockSpec((1, OUT_PADDED), lambda i: (0, 0)),             # resident bias
        ],
        out_specs=pl.BlockSpec((tile_b, OUT_FEATURES), lambda i: (i, 0)),
        compiler_params=pltpu.CompilerParams(
            dimension_semantics=("parallel",)),    # batch axis sharded across TCs
        cost_estimate=cost,
    )(x_flat, w_padded, b_padded)

    return out


if __name__ == "__main__":
    key = jax.random.PRNGKey(0)
    kx, kw, kb = jax.random.split(key, 3)

    B = 8
    # Deterministic synthetic params mirroring nn.Linear(784, 10).
    bound = 1.0 / (IN_FEATURES ** 0.5)
    weight = jax.random.uniform(kw, (OUT_FEATURES, IN_FEATURES),
                                minval=-bound, maxval=bound, dtype=jnp.float32)
    bias = jax.random.uniform(kb, (OUT_FEATURES,),
                              minval=-bound, maxval=bound, dtype=jnp.float32)

    x = jax.random.normal(kx, (B, 1, 28, 28), dtype=jnp.float32)   # NCHW

    w_padded, b_padded = prepare_params(weight, bias)   # hoisted, done once
    out = simple_model_forward(x, w_padded, b_padded)
    out = jax.block_until_ready(out)

    # Reference with identical bf16 rounding of x/W, f32 accumulation.
    x_bf = x.reshape(B, -1).astype(jnp.bfloat16).astype(jnp.float32)
    w_bf = weight.astype(jnp.bfloat16).astype(jnp.float32)
    ref_bf16 = x_bf @ w_bf.T + bias
    # Full-precision reference (looser tolerance — bf16 MXU path).
    ref_f32 = x.reshape(B, -1) @ weight.T + bias

    assert out.shape == (B, OUT_FEATURES)
    assert jnp.allclose(out, ref_bf16, atol=1e-3, rtol=1e-3), \
        float(jnp.max(jnp.abs(out - ref_bf16)))
    assert jnp.allclose(out, ref_f32, atol=2e-2, rtol=2e-2), \
        float(jnp.max(jnp.abs(out - ref_f32)))

    print("KERNEL_OK")
</pallas_src>

<mosaic_0001>
module attributes {stable_mosaic.version = 11 : i64} {
  func.func @linear_kernel(%arg0: i32, %arg1: memref<16x784xf32, #tpu.memory_space<vmem>>, %arg2: memref<784x128xbf16, #tpu.memory_space<vmem>>, %arg3: memref<1x128xf32, #tpu.memory_space<vmem>>, %arg4: memref<16x10xf32, #tpu.memory_space<vmem>>) attributes {dimension_semantics = [#tpu.dimension_semantics<parallel>], iteration_bounds = array<i64: 1>, scalar_prefetch = 0 : i64, scratch_operands = 0 : i64, tpu.core_type = #tpu.core_type<tc>, window_params = [{transform_indices = @transform_0, window_bounds = array<i64: 16, 784>}, {pipeline_mode = #tpu.pipeline_mode<synchronous>, transform_indices = @transform_1, window_bounds = array<i64: 784, 128>}, {pipeline_mode = #tpu.pipeline_mode<synchronous>, transform_indices = @transform_2, window_bounds = array<i64: 1, 128>}, {transform_indices = @transform_3, window_bounds = array<i64: 16, 10>}]} {
    %c0 = arith.constant 0 : index
    %c0_0 = arith.constant 0 : index
    %0 = vector.load %arg1[%c0, %c0_0] : memref<16x784xf32, #tpu.memory_space<vmem>>, vector<16x784xf32>
    %1 = arith.truncf %0 : vector<16x784xf32> to vector<16x784xbf16>
    %c0_1 = arith.constant 0 : index
    %c0_2 = arith.constant 0 : index
    %2 = vector.load %arg2[%c0_1, %c0_2] : memref<784x128xbf16, #tpu.memory_space<vmem>>, vector<784x128xbf16>
    %cst = arith.constant dense<0.000000e+00> : vector<16x128xf32>
    %3 = tpu.matmul %1, %2, %cst {dimension_numbers = #tpu.dot_dimension_numbers<[1], [0], [0], [1], [0, 0, 1, 1], [], []>} : vector<16x784xbf16>, vector<784x128xbf16>, vector<16x128xf32> -> vector<16x128xf32>
    %c0_3 = arith.constant 0 : index
    %c0_4 = arith.constant 0 : index
    %4 = vector.load %arg3[%c0_3, %c0_4] : memref<1x128xf32, #tpu.memory_space<vmem>>, vector<1x128xf32>
    %5 = vector.broadcast %4 : vector<1x128xf32> to vector<16x128xf32>
    %6 = arith.addf %3, %5 : vector<16x128xf32>
    %7 = vector.extract_strided_slice %6 {offsets = [0, 0], sizes = [16, 10], strides = [1, 1]} : vector<16x128xf32> to vector<16x10xf32>
    %c0_5 = arith.constant 0 : index
    %c0_6 = arith.constant 0 : index
    %8 = vector.load %arg4[%c0_5, %c0_6] : memref<16x10xf32, #tpu.memory_space<vmem>>, vector<16x10xf32>
    tpu.vector_store %arg4[%c0_5, %c0_6], %7 {strides = array<i32>} : memref<16x10xf32, #tpu.memory_space<vmem>>, vector<16x10xf32>,
    return
  }
  func.func @transform_0(%arg0: i32) -> (i32, i32) {
    %c0_i32 = arith.constant 0 : i32
    %c0_i32_0 = arith.constant 0 : i32
    return %arg0, %c0_i32 : i32, i32
  }
  func.func @transform_1(%arg0: i32) -> (i32, i32) {
    %c0_i32 = arith.constant 0 : i32
    %c0_i32_0 = arith.constant 0 : i32
    %c0_i32_1 = arith.constant 0 : i32
    return %c0_i32, %c0_i32_0 : i32, i32
  }
  func.func @transform_2(%arg0: i32) -> (i32, i32) {
    %c0_i32 = arith.constant 0 : i32
    %c0_i32_0 = arith.constant 0 : i32
    %c0_i32_1 = arith.constant 0 : i32
    return %c0_i32, %c0_i32_0 : i32, i32
  }
  func.func @transform_3(%arg0: i32) -> (i32, i32) {
    %c0_i32 = arith.constant 0 : i32
    %c0_i32_0 = arith.constant 0 : i32
    return %arg0, %c0_i32 : i32, i32
  }
}

</mosaic_0001>

<llo_original>
// kernel: tpu_custom_call.1
$region0: #{tpu_custom_call.1}
  #allocation0 [shape = 'u32[]', space=smem, size = 0x4, offset = 0x4, fixed_abs, tag = 'smem constant byte address 0x4 - core index']
  #allocation1 [shape = 'u32[72,128]{1,0:T(1,128)}', space=vmem, size = 0x9000, scoped, tag = 'internal scratch']
  %s0 = inlined_call_operand.hbm [shape: f32[8,784], index: 0, kind: input, shape index: {}]
  %s1 = inlined_call_operand.hbm [shape: bf16[784,128], index: 1, kind: input, shape index: {}]
  %s2 = inlined_call_operand.vmem [shape: f32[1,128], index: 2, kind: input, shape index: {}]
  %s3 = inlined_call_operand.hbm [shape: f32[8,10], index: 3, kind: output, shape index: {}]
  %s4 = sld [smem:[#allocation0]]
  $region30: #{tpu_custom_call.1} parent=0
    _
  %s6 = ssub.s32 1, %s4
  %s7 = scalar_select 0, %s6, %s4
  $region1: #{tpu_custom_call.1} parent=0
    #allocation2 [shape = 'u8[57344]{0}', space=vmem, size = 0xe000, scoped, tag = 'input window, operand 0, single buffered']
    #allocation3 [shape = 's32[1]{0}', space=sflag, size = 0x4, scoped, tag = 'scoped memory for tpu_custom_call.1']
    #allocation4 [shape = 's32[1]{0}', space=sflag, size = 0x4, scoped, tag = 'scoped memory for tpu_custom_call.1']
    #allocation5 [shape = 'u8[200704]{0}', space=vmem, size = 0x31000, scoped, tag = 'input window, operand 1, single buffered']
    #allocation6 [shape = 's32[1]{0}', space=sflag, size = 0x4, scoped, tag = 'scoped memory for tpu_custom_call.1']
    #allocation7 [shape = 'u8[8192]{0}', space=vmem, size = 0x2000, scoped, tag = 'output window, operand 0, single buffered']
    %8 = vsyncpa [#allocation3], 0
    %9 = vsyncpa [#allocation6], 0
    %10 = vsyncpa [#allocation4], 0
    // Predicated region
    $region2: #{tpu_custom_call.1} parent=1 // pred_check
      _
    $region3: #{tpu_custom_call.1} parent=1 // pred_check_branch
      %12 = sbr.rel (0) target = $region5
    $region4: #{tpu_custom_call.1} parent=1 // pred_region
      %14 = vsyncadd [#allocation3], 896
      %s15 = sshll.u32 %s0, 4
      %s16 = int_to_ptr.hbm [resolvable:$true] %s15
      %s17 = sshll.u32 [#allocation2], 4
      %s18 = int_to_ptr.vmem [resolvable:$true] %s17
      %23 = dma.hbm_to_vmem [thread:$0]  %s16, 896, %s18, [#allocation3], 896, 896, 56
    $region5: #{tpu_custom_call.1} parent=1 // pred_fallthru
      _
    // Predicated region
    $region6: #{tpu_custom_call.1} parent=1 // pred_check
      _
    $region7: #{tpu_custom_call.1} parent=1 // pred_check_branch
      %25 = sbr.rel (0) target = $region9
    $region8: #{tpu_custom_call.1} parent=1 // pred_region
      %27 = vsyncadd [#allocation6], 0
      %s28 = sshll.u32 %s1, 4
      %s29 = int_to_ptr.hbm [resolvable:$true] %s28
      %s30 = sshll.u32 [#allocation5], 4
      %s31 = int_to_ptr.vmem [resolvable:$true] %s30
      %36 = dma.hbm_to_vmem [thread:$0]  %s29, 6272, %s31, [#allocation6], 64, 64, 4
    $region9: #{tpu_custom_call.1} parent=1 // pred_fallthru
      _
    // Predicated region
    $region10: #{tpu_custom_call.1} parent=1 // pred_check
      _
    $region11: #{tpu_custom_call.1} parent=1 // pred_check_branch
      %38 = sbr.rel (0) target = $region13
    $region12: #{tpu_custom_call.1} parent=1 // pred_region
      _
    $region13: #{tpu_custom_call.1} parent=1 // pred_fallthru
      _
    // Predicated region
    $region14: #{tpu_custom_call.1} parent=1 // pred_check
      _
    $region15: #{tpu_custom_call.1} parent=1 // pred_check_branch
      %40 = sbr.rel (0) target = $region17
    $region16: #{tpu_custom_call.1} parent=1 // pred_region
      %42 = dma.done [#allocation3], 1792
    $region17: #{tpu_custom_call.1} parent=1 // pred_fallthru
      _
    // Predicated region
    $region18: #{tpu_custom_call.1} parent=1 // pred_check
      _
    $region19: #{tpu_custom_call.1} parent=1 // pred_check_branch
      %44 = sbr.rel (0) target = $region21
    $region20: #{tpu_custom_call.1} parent=1 // pred_region
      %46 = dma.done [#allocation6], 6272
    $region21: #{tpu_custom_call.1} parent=1 // pred_fallthru
      _
    %v48 = vld [vmem:[#allocation2] sm:$0xff]
    %v49 = vld [vmem:[#allocation2 + $0x8] sm:$0xff]
    %v50 = vld [vmem:[#allocation2 + $0x10] sm:$0xff]
    %v51 = vld [vmem:[#allocation2 + $0x18] sm:$0xff]
    %v52 = vld [vmem:[#allocation2 + $0x20] sm:$0xff]
    %v53 = vld [vmem:[#allocation2 + $0x28] sm:$0xff]
    %v54 = vld [vmem:[#allocation2 + $0x30] sm:$0xff]
    %v55 = vld [vmem:[#allocation2 + $0x38] sm:$0xff]
    %v56 = vld [vmem:[#allocation2 + $0x40] sm:$0xff]
    %v57 = vld [vmem:[#allocation2 + $0x48] sm:$0xff]
    %v58 = vld [vmem:[#allocation2 + $0x50] sm:$0xff]
    %v59 = vld [vmem:[#allocation2 + $0x58] sm:$0xff]
    %v60 = vld [vmem:[#allocation2 + $0x60] sm:$0xff]
    %v61 = vld [vmem:[#allocation2 + $0x68] sm:$0xff]
    %v62 = vpack.c.bf16 %v55, %v48
    %v63 = vpack.c.bf16 %v56, %v49
    %v64 = vpack.c.bf16 %v57, %v50
    %v65 = vpack.c.bf16 %v58, %v51
    %v66 = vpack.c.bf16 %v59, %v52
    %v67 = vpack.c.bf16 %v60, %v53
    %v68 = vpack.c.bf16 %v61, %v54
    %v69 = vld [vmem:[#allocation5] sm:$0xf]
    %v70 = vld [vmem:[#allocation5 + $0x4] sm:$0xf]
    %v71 = vld [vmem:[#allocation5 + $0x8] sm:$0xf]
    %v72 = vld [vmem:[#allocation5 + $0xc] sm:$0xf]
    %v73 = vld [vmem:[#allocation5 + $0x10] sm:$0xf]
    %v74 = vld [vmem:[#allocation5 + $0x14] sm:$0xf]
    %v75 = vld [vmem:[#allocation5 + $0x18] sm:$0xf]
    %v76 = vld [vmem:[#allocation5 + $0x1c] sm:$0xf]
    %v77 = vld [vmem:[#allocation5 + $0x20] sm:$0xf]
    %v78 = vld [vmem:[#allocation5 + $0x24] sm:$0xf]
    %v79 = vld [vmem:[#allocation5 + $0x28] sm:$0xf]
    %v80 = vld [vmem:[#allocation5 + $0x2c] sm:$0xf]
    %v81 = vld [vmem:[#allocation5 + $0x30] sm:$0xf]
    %v82 = vld [vmem:[#allocation5 + $0x34] sm:$0xf]
    %v83 = vld [vmem:[#allocation5 + $0x38] sm:$0xf]
    %v84 = vld [vmem:[#allocation5 + $0x3c] sm:$0xf]
    %v85 = vld [vmem:[#allocation5 + $0x40] sm:$0xf]
    %v86 = vld [vmem:[#allocation5 + $0x44] sm:$0xf]
    %v87 = vld [vmem:[#allocation5 + $0x48] sm:$0xf]
    %v88 = vld [vmem:[#allocation5 + $0x4c] sm:$0xf]
    %v89 = vld [vmem:[#allocation5 + $0x50] sm:$0xf]
    %v90 = vld [vmem:[#allocation5 + $0x54] sm:$0xf]
    %v91 = vld [vmem:[#allocation5 + $0x58] sm:$0xf]
    %v92 = vld [vmem:[#allocation5 + $0x5c] sm:$0xf]
    %v93 = vld [vmem:[#allocation5 + $0x60] sm:$0xf]
    %v94 = vld [vmem:[#allocation5 + $0x64] sm:$0xf]
    %v95 = vld [vmem:[#allocation5 + $0x68] sm:$0xf]
    %v96 = vld [vmem:[#allocation5 + $0x6c] sm:$0xf]
    %v97 = vld [vmem:[#allocation5 + $0x70] sm:$0xf]
    %v98 = vld [vmem:[#allocation5 + $0x74] sm:$0xf]
    %v99 = vld [vmem:[#allocation5 + $0x78] sm:$0xf]
    %v100 = vld [vmem:[#allocation5 + $0x7c] sm:$0xf]
    %v101 = vld [vmem:[#allocation5 + $0x80] sm:$0xf]
    %v102 = vld [vmem:[#allocation5 + $0x84] sm:$0xf]
    %v103 = vld [vmem:[#allocation5 + $0x88] sm:$0xf]
    %v104 = vld [vmem:[#allocation5 + $0x8c] sm:$0xf]
    %v105 = vld [vmem:[#allocation5 + $0x90] sm:$0xf]
    %v106 = vld [vmem:[#allocation5 + $0x94] sm:$0xf]
    %v107 = vld [vmem:[#allocation5 + $0x98] sm:$0xf]
    %v108 = vld [vmem:[#allocation5 + $0x9c] sm:$0xf]
    %v109 = vld [vmem:[#allocation5 + $0xa0] sm:$0xf]
    %v110 = vld [vmem:[#allocation5 + $0xa4] sm:$0xf]
    %v111 = vld [vmem:[#allocation5 + $0xa8] sm:$0xf]
    %v112 = vld [vmem:[#allocation5 + $0xac] sm:$0xf]
    %v113 = vld [vmem:[#allocation5 + $0xb0] sm:$0xf]
    %v114 = vld [vmem:[#allocation5 + $0xb4] sm:$0xf]
    %v115 = vld [vmem:[#allocation5 + $0xb8] sm:$0xf]
    %v116 = vld [vmem:[#allocation5 + $0xbc] sm:$0xf]
    %v117 = vld [vmem:[#allocation5 + $0xc0] sm:$0xf]
    %v118 = vld [vmem:[#allocation5 + $0xc4] sm:$0xf]
    %v119 = vld [vmem:[#allocation5 + $0xc8] sm:$0xf]
    %v120 = vld [vmem:[#allocation5 + $0xcc] sm:$0xf]
    %v121 = vld [vmem:[#allocation5 + $0xd0] sm:$0xf]
    %v122 = vld [vmem:[#allocation5 + $0xd4] sm:$0xf]
    %v123 = vld [vmem:[#allocation5 + $0xd8] sm:$0xf]
    %v124 = vld [vmem:[#allocation5 + $0xdc] sm:$0xf]
    %v125 = vld [vmem:[#allocation5 + $0xe0] sm:$0xf]
    %v126 = vld [vmem:[#allocation5 + $0xe4] sm:$0xf]
    %v127 = vld [vmem:[#allocation5 + $0xe8] sm:$0xf]
    %v128 = vld [vmem:[#allocation5 + $0xec] sm:$0xf]
    %v129 = vld [vmem:[#allocation5 + $0xf0] sm:$0xf]
    %v130 = vld [vmem:[#allocation5 + $0xf4] sm:$0xf]
    %v131 = vld [vmem:[#allocation5 + $0xf8] sm:$0xf]
    %v132 = vld [vmem:[#allocation5 + $0xfc] sm:$0xf]
    %v133 = vld [vmem:[#allocation5 + $0x100] sm:$0xf]
    %v134 = vld [vmem:[#allocation5 + $0x104] sm:$0xf]
    %v135 = vld [vmem:[#allocation5 + $0x108] sm:$0xf]
    %v136 = vld [vmem:[#allocation5 + $0x10c] sm:$0xf]
    %v137 = vld [vmem:[#allocation5 + $0x110] sm:$0xf]
    %v138 = vld [vmem:[#allocation5 + $0x114] sm:$0xf]
    %v139 = vld [vmem:[#allocation5 + $0x118] sm:$0xf]
    %v140 = vld [vmem:[#allocation5 + $0x11c] sm:$0xf]
    %v141 = vld [vmem:[#allocation5 + $0x120] sm:$0xf]
    %v142 = vld [vmem:[#allocation5 + $0x124] sm:$0xf]
    %v143 = vld [vmem:[#allocation5 + $0x128] sm:$0xf]
    %v144 = vld [vmem:[#allocation5 + $0x12c] sm:$0xf]
    %v145 = vld [vmem:[#allocation5 + $0x130] sm:$0xf]
    %v146 = vld [vmem:[#allocation5 + $0x134] sm:$0xf]
    %v147 = vld [vmem:[#allocation5 + $0x138] sm:$0xf]
    %v148 = vld [vmem:[#allocation5 + $0x13c] sm:$0xf]
    %v149 = vld [vmem:[#allocation5 + $0x140] sm:$0xf]
    %v150 = vld [vmem:[#allocation5 + $0x144] sm:$0xf]
    %v151 = vld [vmem:[#allocation5 + $0x148] sm:$0xf]
    %v152 = vld [vmem:[#allocation5 + $0x14c] sm:$0xf]
    %v153 = vld [vmem:[#allocation5 + $0x150] sm:$0xf]
    %v154 = vld [vmem:[#allocation5 + $0x154] sm:$0xf]
    %v155 = vld [vmem:[#allocation5 + $0x158] sm:$0xf]
    %v156 = vld [vmem:[#allocation5 + $0x15c] sm:$0xf]
    %v157 = vld [vmem:[#allocation5 + $0x160] sm:$0xf]
    %v158 = vld [vmem:[#allocation5 + $0x164] sm:$0xf]
    %v159 = vld [vmem:[#allocation5 + $0x168] sm:$0xf]
    %v160 = vld [vmem:[#allocation5 + $0x16c] sm:$0xf]
    %v161 = vld [vmem:[#allocation5 + $0x170] sm:$0xf]
    %v162 = vld [vmem:[#allocation5 + $0x174] sm:$0xf]
    %v163 = vld [vmem:[#allocation5 + $0x178] sm:$0xf]
    %v164 = vld [vmem:[#allocation5 + $0x17c] sm:$0xf]
    %v165 = vld [vmem:[#allocation5 + $0x180] sm:$0xf]
    %v166 = vld [vmem:[#allocation5 + $0x184] sm:$0xf]
    %v167 = vld [vmem:[%s2] sm:$0x1]
    %v169 = vperm.slane %v167, 0
    %v269 = vunpack.c.l.b16 %v69
    %v270 = vunpack.c.l.b16 %v70
    %v271 = vunpack.c.l.b16 %v71
    %v272 = vunpack.c.l.b16 %v72
    %v273 = vunpack.c.l.b16 %v73
    %v274 = vunpack.c.l.b16 %v74
    %v275 = vunpack.c.l.b16 %v75
    %v276 = vunpack.c.l.b16 %v76
    %v277 = vunpack.c.l.b16 %v77
    %v278 = vunpack.c.l.b16 %v78
    %v279 = vunpack.c.l.b16 %v79
    %v280 = vunpack.c.l.b16 %v80
    %v281 = vunpack.c.l.b16 %v81
    %v282 = vunpack.c.l.b16 %v82
    %v283 = vunpack.c.l.b16 %v83
    %v284 = vunpack.c.l.b16 %v84
    %v285 = vunpack.c.l.b16 %v85
    %v286 = vunpack.c.l.b16 %v86
    %v287 = vunpack.c.l.b16 %v87
    %v288 = vunpack.c.l.b16 %v88
    %v289 = vunpack.c.l.b16 %v89
    %v290 = vunpack.c.l.b16 %v90
    %v291 = vunpack.c.l.b16 %v91
    %v292 = vunpack.c.l.b16 %v92
    %v293 = vunpack.c.l.b16 %v93
    %v294 = vunpack.c.l.b16 %v94
    %v295 = vunpack.c.l.b16 %v95
    %v296 = vunpack.c.l.b16 %v96
    %v297 = vunpack.c.l.b16 %v97
    %v298 = vunpack.c.l.b16 %v98
    %v299 = vunpack.c.l.b16 %v99
    %v300 = vunpack.c.l.b16 %v100
    %v301 = vunpack.c.l.b16 %v101
    %v302 = vunpack.c.l.b16 %v102
    %v303 = vunpack.c.l.b16 %v103
    %v304 = vunpack.c.l.b16 %v104
    %v305 = vunpack.c.l.b16 %v105
    %v306 = vunpack.c.l.b16 %v106
    %v307 = vunpack.c.l.b16 %v107
    %v308 = vunpack.c.l.b16 %v108
    %v309 = vunpack.c.l.b16 %v109
    %v310 = vunpack.c.l.b16 %v110
    %v311 = vunpack.c.l.b16 %v111
    %v312 = vunpack.c.l.b16 %v112
    %v313 = vunpack.c.l.b16 %v113
    %v314 = vunpack.c.l.b16 %v114
    %v315 = vunpack.c.l.b16 %v115
    %v316 = vunpack.c.l.b16 %v116
    %v317 = vunpack.c.l.b16 %v117
    %v318 = vunpack.c.l.b16 %v118
    %v319 = vunpack.c.l.b16 %v119
    %v320 = vunpack.c.l.b16 %v120
    %v321 = vunpack.c.l.b16 %v121
    %v322 = vunpack.c.l.b16 %v122
    %v323 = vunpack.c.l.b16 %v123
    %v324 = vunpack.c.l.b16 %v124
    %v325 = vunpack.c.l.b16 %v125
    %v326 = vunpack.c.l.b16 %v126
    %v327 = vunpack.c.l.b16 %v127
    %v328 = vunpack.c.l.b16 %v128
    %v329 = vunpack.c.l.b16 %v129
    %v330 = vunpack.c.l.b16 %v130
    %v331 = vunpack.c.l.b16 %v131
    %v332 = vunpack.c.l.b16 %v132
    %v333 = vunpack.c.l.b16 %v133
    %v334 = vunpack.c.l.b16 %v134
    %v335 = vunpack.c.l.b16 %v135
    %v336 = vunpack.c.l.b16 %v136
    %v337 = vunpack.c.l.b16 %v137
    %v338 = vunpack.c.l.b16 %v138
    %v339 = vunpack.c.l.b16 %v139
    %v340 = vunpack.c.l.b16 %v140
    %v341 = vunpack.c.l.b16 %v141
    %v342 = vunpack.c.l.b16 %v142
    %v343 = vunpack.c.l.b16 %v143
    %v344 = vunpack.c.l.b16 %v144
    %v345 = vunpack.c.l.b16 %v145
    %v346 = vunpack.c.l.b16 %v146
    %v347 = vunpack.c.l.b16 %v147
    %v348 = vunpack.c.l.b16 %v148
    %v349 = vunpack.c.l.b16 %v149
    %v350 = vunpack.c.l.b16 %v150
    %v351 = vunpack.c.l.b16 %v151
    %v352 = vunpack.c.l.b16 %v152
    %v353 = vunpack.c.l.b16 %v153
    %v354 = vunpack.c.l.b16 %v154
    %v355 = vunpack.c.l.b16 %v155
    %v356 = vunpack.c.l.b16 %v156
    %v357 = vunpack.c.l.b16 %v157
    %v358 = vunpack.c.l.b16 %v158
    %v359 = vunpack.c.l.b16 %v159
    %v360 = vunpack.c.l.b16 %v160
    %v361 = vunpack.c.l.b16 %v161
    %v362 = vunpack.c.l.b16 %v162
    %v363 = vunpack.c.l.b16 %v163
    %v364 = vunpack.c.l.b16 %v164
    %v365 = vunpack.c.l.b16 %v165
    %v366 = vunpack.c.l.b16 %v166
    %v367 = vpack.c.b16 %v270, %v269
    %v368 = vpack.c.b16 %v272, %v271
    %v369 = vpack.c.b16 %v274, %v273
    %v370 = vpack.c.b16 %v276, %v275
    %v371 = vpack.c.b16 %v278, %v277
    %v372 = vpack.c.b16 %v280, %v279
    %v373 = vpack.c.b16 %v282, %v281
    %v374 = vpack.c.b16 %v284, %v283
    %v375 = vpack.c.b16 %v286, %v285
    %v376 = vpack.c.b16 %v288, %v287
    %v377 = vpack.c.b16 %v290, %v289
    %v378 = vpack.c.b16 %v292, %v291
    %v379 = vpack.c.b16 %v294, %v293
    %v380 = vpack.c.b16 %v296, %v295
    %v381 = vpack.c.b16 %v298, %v297
    %v382 = vpack.c.b16 %v300, %v299
    %v383 = vpack.c.b16 %v302, %v301
    %v384 = vpack.c.b16 %v304, %v303
    %v385 = vpack.c.b16 %v306, %v305
    %v386 = vpack.c.b16 %v308, %v307
    %v387 = vpack.c.b16 %v310, %v309
    %v388 = vpack.c.b16 %v312, %v311
    %v389 = vpack.c.b16 %v314, %v313
    %v390 = vpack.c.b16 %v316, %v315
    %v391 = vpack.c.b16 %v318, %v317
    %v392 = vpack.c.b16 %v320, %v319
    %v393 = vpack.c.b16 %v322, %v321
    %v394 = vpack.c.b16 %v324, %v323
    %v395 = vpack.c.b16 %v326, %v325
    %v396 = vpack.c.b16 %v328, %v327
    %v397 = vpack.c.b16 %v330, %v329
    %v398 = vpack.c.b16 %v332, %v331
    %v399 = vpack.c.b16 %v334, %v333
    %v400 = vpack.c.b16 %v336, %v335
    %v401 = vpack.c.b16 %v338, %v337
    %v402 = vpack.c.b16 %v340, %v339
    %v403 = vpack.c.b16 %v342, %v341
    %v404 = vpack.c.b16 %v344, %v343
    %v405 = vpack.c.b16 %v346, %v345
    %v406 = vpack.c.b16 %v348, %v347
    %v407 = vpack.c.b16 %v350, %v349
    %v408 = vpack.c.b16 %v352, %v351
    %v409 = vpack.c.b16 %v354, %v353
    %v410 = vpack.c.b16 %v356, %v355
    %v411 = vpack.c.b16 %v358, %v357
    %v412 = vpack.c.b16 %v360, %v359
    %v413 = vpack.c.b16 %v362, %v361
    %v414 = vpack.c.b16 %v364, %v363
    %v415 = vpack.c.b16 %v366, %v365
    %vm465 = vcmask 130048
    %v467 = vsel %vm465, %v68, 0
    %469 = vmatpush.bf16.msra.mxu0 %v374
    %470 = vmatpush.bf16.msra.mxu0 %v373
    %471 = vmatpush.bf16.msra.mxu0 %v372
    %472 = vmatpush.bf16.msra.mxu0 %v371
    %473 = vmatpush.bf16.msra.mxu0 %v370
    %474 = vmatpush.bf16.msra.mxu0 %v369
    %475 = vmatpush.bf16.msra.mxu0 %v368
    %476 = vmatpush.bf16.msra.mxu0 %v367
    %477 = vmatmul.bf16.gmra.mxu0 %v62
    %v478 = vpop.f32.mrf.mxu0
    %v479 = vadd.f32 %v169, %v478
    %v480 = vpop.f32.mrf.mxu0
    %v481 = vadd.f32 %v169, %v480
    %482 = vdwg.mxu0
    %483 = vmatpush.bf16.msra.mxu0 %v382
    %484 = vmatpush.bf16.msra.mxu0 %v381
    %485 = vmatpush.bf16.msra.mxu0 %v380
    %486 = vmatpush.bf16.msra.mxu0 %v379
    %487 = vmatpush.bf16.msra.mxu0 %v378
    %488 = vmatpush.bf16.msra.mxu0 %v377
    %489 = vmatpush.bf16.msra.mxu0 %v376
    %490 = vmatpush.bf16.msra.mxu0 %v375
    %491 = vmatmul.bf16.gmra.mxu0 %v63
    %v492 = vpop.f32.mrf.mxu0
    %v493 = vadd.f32 %v479, %v492
    %v494 = vpop.f32.mrf.mxu0
    %v495 = vadd.f32 %v481, %v494
    %496 = vdwg.mxu0
    %497 = vmatpush.bf16.msra.mxu0 %v390
    %498 = vmatpush.bf16.msra.mxu0 %v389
    %499 = vmatpush.bf16.msra.mxu0 %v388
    %500 = vmatpush.bf16.msra.mxu0 %v387
    %501 = vmatpush.bf16.msra.mxu0 %v386
    %502 = vmatpush.bf16.msra.mxu0 %v385
    %503 = vmatpush.bf16.msra.mxu0 %v384
    %504 = vmatpush.bf16.msra.mxu0 %v383
    %505 = vmatmul.bf16.gmra.mxu0 %v64
    %v506 = vpop.f32.mrf.mxu0
    %v507 = vadd.f32 %v493, %v506
    %v508 = vpop.f32.mrf.mxu0
    %v509 = vadd.f32 %v495, %v508
    %510 = vdwg.mxu0
    %511 = vmatpush.bf16.msra.mxu0 %v398
    %512 = vmatpush.bf16.msra.mxu0 %v397
    %513 = vmatpush.bf16.msra.mxu0 %v396
    %514 = vmatpush.bf16.msra.mxu0 %v395
    %515 = vmatpush.bf16.msra.mxu0 %v394
    %516 = vmatpush.bf16.msra.mxu0 %v393
    %517 = vmatpush.bf16.msra.mxu0 %v392
    %518 = vmatpush.bf16.msra.mxu0 %v391
    %519 = vmatmul.bf16.gmra.mxu0 %v65
    %v520 = vpop.f32.mrf.mxu0
    %v521 = vadd.f32 %v507, %v520
    %v522 = vpop.f32.mrf.mxu0
    %v523 = vadd.f32 %v509, %v522
    %524 = vdwg.mxu0
    %525 = vmatpush.bf16.msra.mxu0 %v406
    %526 = vmatpush.bf16.msra.mxu0 %v405
    %527 = vmatpush.bf16.msra.mxu0 %v404
    %528 = vmatpush.bf16.msra.mxu0 %v403
    %529 = vmatpush.bf16.msra.mxu0 %v402
    %530 = vmatpush.bf16.msra.mxu0 %v401
    %531 = vmatpush.bf16.msra.mxu0 %v400
    %532 = vmatpush.bf16.msra.mxu0 %v399
    %533 = vmatmul.bf16.gmra.mxu0 %v66
    %v534 = vpop.f32.mrf.mxu0
    %v535 = vadd.f32 %v521, %v534
    %v536 = vpop.f32.mrf.mxu0
    %v537 = vadd.f32 %v523, %v536
    %538 = vdwg.mxu0
    %539 = vmatpush.bf16.msra.mxu0 %v414
    %540 = vmatpush.bf16.msra.mxu0 %v413
    %541 = vmatpush.bf16.msra.mxu0 %v412
    %542 = vmatpush.bf16.msra.mxu0 %v411
    %543 = vmatpush.bf16.msra.mxu0 %v410
    %544 = vmatpush.bf16.msra.mxu0 %v409
    %545 = vmatpush.bf16.msra.mxu0 %v408
    %546 = vmatpush.bf16.msra.mxu0 %v407
    %547 = vmatmul.bf16.gmra.mxu0 %v67
    %v548 = vpop.f32.mrf.mxu0
    %v549 = vadd.f32 %v535, %v548
    %v550 = vpop.f32.mrf.mxu0
    %v551 = vadd.f32 %v537, %v550
    %552 = vdwg.mxu0
    %553 = vmatpush.bf16.msra.mxu0 0
    %554 = vmatpush.bf16.msra.mxu0 0
    %555 = vmatpush.bf16.msra.mxu0 0
    %556 = vmatpush.bf16.msra.mxu0 0
    %557 = vmatpush.bf16.msra.mxu0 0
    %558 = vmatpush.bf16.msra.mxu0 0
    %559 = vmatpush.bf16.msra.mxu0 0
    %560 = vmatpush.bf16.msra.mxu0 %v415
    %561 = vmatmul.bf16.gmra.mxu0 %v467
    %v562 = vpop.f32.mrf.mxu0
    %v563 = vadd.f32 %v549, %v562
    %v564 = vpop.f32.mrf.mxu0
    %v565 = vadd.f32 %v551, %v564
    %566 = vdwg.mxu0
    %vm567 = vcmask 80896
    %568 = vst.msk [vmem:[#allocation7] sm:$0xff] %vm567, %v563
    %569 = vst.msk [vmem:[#allocation7 + $0x8] sm:$0xff] %vm567, %v565
    // Predicated region
    $region22: #{tpu_custom_call.1} parent=1 // pred_check
      _
    $region23: #{tpu_custom_call.1} parent=1 // pred_check_branch
      %571 = sbr.rel (0) target = $region25
    $region24: #{tpu_custom_call.1} parent=1 // pred_region
      %573 = vsyncadd [#allocation4], 128
      %s574 = sshll.u32 [#allocation7], 4
      %s575 = int_to_ptr.vmem [resolvable:$true] %s574
      %s576 = sshll.u32 %s3, 4
      %s577 = int_to_ptr.hbm [resolvable:$true] %s576
      %582 = dma.vmem_to_hbm [thread:$0]  %s575, 128, %s577, [#allocation4], 128, 128, 8
    $region25: #{tpu_custom_call.1} parent=1 // pred_fallthru
      _
    // Predicated region
    $region26: #{tpu_custom_call.1} parent=1 // pred_check
      _
    $region27: #{tpu_custom_call.1} parent=1 // pred_check_branch
      %584 = sbr.rel (0) target = $region29
    $region28: #{tpu_custom_call.1} parent=1 // pred_region
      %586 = dma.done [#allocation4], 256
    $region29: #{tpu_custom_call.1} parent=1 // pred_fallthru
      _
    %587 = vsyncpa [#allocation3], 1
    %588 = vsyncpa [#allocation6], 1
    %589 = vsyncpa [#allocation4], 1

</llo_original>
